<compile_context>
chip_gen: v5e
topology: v5e:2x2
jax: 0.10.0
libtpu: 0.0.40
codegen_flags: <defaults>
</compile_context>

<pallas_src>
import jax
import jax.numpy as jnp
from jax.experimental import pallas as pl
from jax.experimental.pallas import tpu as pltpu


def _round_up(x, m):
    return ((x + m - 1) // m) * m


def _rbf_kernel(gamma):
    neg_gamma = -float(gamma)
    two_gamma = 2.0 * float(gamma)

    def kernel(x_ref, mu_t_ref, musq_ref, w_ref, o_ref):
        x = x_ref[...]                                        # (tb, Kp)
        # cross[b, i] = sum_j x[b, j] * mu[i, j]; mu_t is pre-transposed in
        # the wrapper so the MXU sees the canonical contraction.
        cross = jnp.dot(x, mu_t_ref[...],
                        preferred_element_type=jnp.float32)   # (tb, tn)
        xsq = jnp.sum(x * x, axis=-1, keepdims=True)          # (tb, 1)
        # epilogue: a couple of VPU FMAs + one EUP exp per output element
        t = neg_gamma * (xsq + musq_ref[...])
        o_ref[...] = w_ref[...] * jnp.exp(t + two_gamma * cross)

    return kernel


def rbf_forward(inputs, mu, w, gamma, *, block_b=1024, block_n=None):
    """inputs: (B, 1, D) f32; mu: (D, units); w: (D,). Returns (B, 1, units)."""
    B, S, D = inputs.shape
    assert S == 1, "module's broadcasting pattern; see layout comment"
    units = mu.shape[1]
    assert mu.shape == (D, units) and units == D and w.shape == (D,)

    x2 = inputs.reshape(B, D).astype(jnp.float32)
    # Row i of mu is center i -> cross = x @ mu.T. One-time wrapper transpose
    # keeps the in-kernel matmul canonical (no per-step XLU transpose).
    mu_t = jnp.transpose(mu.astype(jnp.float32))              # (D_feat, units)
    wv = w.astype(jnp.float32)

    # --- contraction (feature) dim padded to a lane multiple.
    Kp = _round_up(D, 128)

    # --- units tile: keep mu fully resident when small (<= 16 MiB), else tile
    #     so the mu block fits v7x's 64 MiB VMEM with headroom.
    Uraw = _round_up(units, 128)
    if block_n is not None:
        tn = _round_up(int(block_n), 128)
    elif Kp * Uraw * 4 <= (16 << 20):
        tn = Uraw
    else:
        tn = max(256, (((8 << 20) // (Kp * 4)) // 256) * 256)
    Up = _round_up(units, tn)

    if Kp != D or Up != units:
        x2 = jnp.pad(x2, ((0, 0), (0, Kp - D)))
        mu_t = jnp.pad(mu_t, ((0, Kp - D), (0, Up - units)))
        wv = jnp.pad(wv, (0, Up - units))

    # hoisted per-center ||mu_i||^2 (padded centers contribute 0).
    musq = jnp.sum(mu_t * mu_t, axis=0).reshape(1, Up)
    w2 = wv.reshape(1, Up)

    # --- batch tile: large enough to amortize per-step overhead, but always
    #     >= 2 grid steps so the "parallel" axis shards across v7x's 2 TCs.
    tb = _round_up(max(int(block_b), 8), 8)
    tb = min(tb, _round_up(B, 8))
    if tb >= 16 and _round_up(B, tb) // tb < 2:
        tb = _round_up((tb + 1) // 2, 8)
    Bp = _round_up(B, tb)
    if Bp != B:
        # Padded batch rows produce finite garbage that is sliced away below
        # (wasted compute only) -- do not remove the [:B, :units] slice.
        x2 = jnp.pad(x2, ((0, Bp - B), (0, 0)))

    nb, nu = Bp // tb, Up // tn
    grid = (nb, nu)

    kernel = _rbf_kernel(gamma)
    out_shape = jax.ShapeDtypeStruct((Bp, Up), jnp.float32)
    cost = pl.CostEstimate(
        flops=2 * Bp * Kp * Up + 6 * Bp * Up,
        transcendentals=Bp * Up,
        bytes_accessed=4 * (Bp * Kp + Kp * Up + 2 * Up + Bp * Up))

    def build(single_buffer_invariants):
        inv_kw = {}
        if single_buffer_invariants:
            # mu_t / musq / w never change across the grid (nu == 1): one VMEM
            # buffer each instead of the default two.
            inv_kw = dict(pipeline_mode=pl.Buffered(1))
        mu_bufs = 1 if single_buffer_invariants else 2
        buf_bytes = 4 * (2 * tb * Kp + 2 * tb * tn
                         + mu_bufs * (Kp * tn + 2 * 8 * tn))
        vmem_limit = min(max(buf_bytes * 3 // 2 + (4 << 20), 16 << 20),
                         64 << 20)
        return pl.pallas_call(
            kernel,
            out_shape=out_shape,
            grid_spec=pltpu.PrefetchScalarGridSpec(
                num_scalar_prefetch=0,
                grid=grid,
                in_specs=[
                    pl.BlockSpec((tb, Kp), lambda i, j: (i, 0)),            # x
                    pl.BlockSpec((Kp, tn), lambda i, j: (0, j), **inv_kw),  # mu^T
                    pl.BlockSpec((1, tn), lambda i, j: (0, j), **inv_kw),   # ||mu||^2
                    pl.BlockSpec((1, tn), lambda i, j: (0, j), **inv_kw),   # w
                ],
                out_specs=pl.BlockSpec((tb, tn), lambda i, j: (i, j)),
            ),
            compiler_params=pltpu.CompilerParams(
                dimension_semantics=("parallel", "parallel"),
                vmem_limit_bytes=vmem_limit),
            cost_estimate=cost,
        )

    single = (nu == 1)
    try:
        out2 = build(single)(x2, mu_t, musq, w2)
    except Exception:
        if not single:
            raise
        # Fallback if BlockSpec pipeline_mode / Buffered(1) is unavailable on
        # this jax build: default double-buffering of the invariant operands.
        out2 = build(False)(x2, mu_t, musq, w2)

    return out2[:B, :units].reshape(B, 1, units)


def rbf_reference(inputs, mu, w, gamma):
    # Literal translation of the torch forward.
    diff = inputs[:, None, ...] - mu                 # unsqueeze(1) - mu
    l2 = jnp.sum(diff * diff, axis=-1)
    return w * jnp.exp(-gamma * l2)


if __name__ == "__main__":
    keys = jax.random.split(jax.random.PRNGKey(0), 6)

    # --- test 1: module-consistent small shapes; resident-mu (nu == 1) path,
    #     batch tiled into 2 grid steps.
    B, D = 16, 128
    gamma = 0.5
    x = 0.1 * jax.random.normal(keys[0], (B, 1, D), dtype=jnp.float32)
    mu = 0.1 * jax.random.normal(keys[1], (D, D), dtype=jnp.float32)  # randn(D, units)
    w = jax.random.normal(keys[2], (D,), dtype=jnp.float32)           # randn(D)

    out = jax.block_until_ready(rbf_forward(x, mu, w, gamma))
    ref = rbf_reference(x, mu, w, gamma)
    assert out.shape == ref.shape == (B, 1, D)
    assert jnp.allclose(out, ref, rtol=1e-4, atol=1e-5)

    # --- test 2: force units tiling (nu == 2) to exercise the streamed-mu
    #     path as well.
    B2, D2 = 16, 256
    gamma2 = 0.25
    x_b = 0.1 * jax.random.normal(keys[3], (B2, 1, D2), dtype=jnp.float32)
    mu_b = 0.1 * jax.random.normal(keys[4], (D2, D2), dtype=jnp.float32)
    w_b = jax.random.normal(keys[5], (D2,), dtype=jnp.float32)

    out_b = jax.block_until_ready(
        rbf_forward(x_b, mu_b, w_b, gamma2, block_n=128))
    ref_b = rbf_reference(x_b, mu_b, w_b, gamma2)
    assert out_b.shape == ref_b.shape == (B2, 1, D2)
    assert jnp.allclose(out_b, ref_b, rtol=1e-4, atol=1e-5)

    print("KERNEL_OK")
</pallas_src>

<mosaic_0001>
module attributes {stable_mosaic.version = 11 : i64} {
  func.func @kernel(%arg0: i32, %arg1: i32, %arg2: memref<8x128xf32, #tpu.memory_space<vmem>>, %arg3: memref<128x128xf32, #tpu.memory_space<vmem>>, %arg4: memref<1x128xf32, #tpu.memory_space<vmem>>, %arg5: memref<1x128xf32, #tpu.memory_space<vmem>>, %arg6: memref<8x128xf32, #tpu.memory_space<vmem>>) attributes {dimension_semantics = [#tpu.dimension_semantics<parallel>, #tpu.dimension_semantics<parallel>], iteration_bounds = array<i64: 2, 1>, scalar_prefetch = 0 : i64, scratch_operands = 0 : i64, tpu.core_type = #tpu.core_type<tc>, window_params = [{transform_indices = @transform_0, window_bounds = array<i64: 8, 128>}, {pipeline_mode = #tpu.pipeline_mode<synchronous>, transform_indices = @transform_1, window_bounds = array<i64: 128, 128>}, {pipeline_mode = #tpu.pipeline_mode<synchronous>, transform_indices = @transform_2, window_bounds = array<i64: 1, 128>}, {pipeline_mode = #tpu.pipeline_mode<synchronous>, transform_indices = @transform_3, window_bounds = array<i64: 1, 128>}, {transform_indices = @transform_4, window_bounds = array<i64: 8, 128>}]} {
    %c0 = arith.constant 0 : index
    %c0_0 = arith.constant 0 : index
    %0 = vector.load %arg2[%c0, %c0_0] : memref<8x128xf32, #tpu.memory_space<vmem>>, vector<8x128xf32>
    %c0_1 = arith.constant 0 : index
    %c0_2 = arith.constant 0 : index
    %1 = vector.load %arg3[%c0_1, %c0_2] : memref<128x128xf32, #tpu.memory_space<vmem>>, vector<128x128xf32>
    %cst = arith.constant dense<0.000000e+00> : vector<8x128xf32>
    %2 = tpu.matmul %0, %1, %cst {dimension_numbers = #tpu.dot_dimension_numbers<[1], [0], [0], [1], [0, 0, 1, 1], [], []>} : vector<8x128xf32>, vector<128x128xf32>, vector<8x128xf32> -> vector<8x128xf32>
    %3 = arith.mulf %0, %0 : vector<8x128xf32>
    %cst_3 = arith.constant dense<0.000000e+00> : vector<8xf32>
    %4 = vector.multi_reduction <add>, %3, %cst_3 [1] : vector<8x128xf32> to vector<8xf32>
    %5 = vector.shape_cast %4 : vector<8xf32> to vector<8x1xf32>
    %c0_4 = arith.constant 0 : index
    %c0_5 = arith.constant 0 : index
    %6 = vector.load %arg4[%c0_4, %c0_5] : memref<1x128xf32, #tpu.memory_space<vmem>>, vector<1x128xf32>
    %7 = vector.broadcast %5 : vector<8x1xf32> to vector<8x128xf32>
    %8 = vector.broadcast %6 : vector<1x128xf32> to vector<8x128xf32>
    %9 = arith.addf %7, %8 : vector<8x128xf32>
    %cst_6 = arith.constant -5.000000e-01 : f32
    %10 = vector.broadcast %cst_6 : f32 to vector<8x128xf32>
    %11 = arith.mulf %10, %9 : vector<8x128xf32>
    %c0_7 = arith.constant 0 : index
    %c0_8 = arith.constant 0 : index
    %12 = vector.load %arg5[%c0_7, %c0_8] : memref<1x128xf32, #tpu.memory_space<vmem>>, vector<1x128xf32>
    %cst_9 = arith.constant 1.000000e+00 : f32
    %13 = vector.broadcast %cst_9 : f32 to vector<8x128xf32>
    %14 = arith.mulf %13, %2 : vector<8x128xf32>
    %15 = arith.addf %11, %14 : vector<8x128xf32>
    %16 = math.exp %15 : vector<8x128xf32>
    %17 = vector.broadcast %12 : vector<1x128xf32> to vector<8x128xf32>
    %18 = arith.mulf %17, %16 : vector<8x128xf32>
    %c0_10 = arith.constant 0 : index
    %c0_11 = arith.constant 0 : index
    %19 = vector.load %arg6[%c0_10, %c0_11] : memref<8x128xf32, #tpu.memory_space<vmem>>, vector<8x128xf32>
    tpu.vector_store %arg6[%c0_10, %c0_11], %18 {strides = array<i32>} : memref<8x128xf32, #tpu.memory_space<vmem>>, vector<8x128xf32>,
    return
  }
  func.func @transform_0(%arg0: i32, %arg1: i32) -> (i32, i32) {
    %c0_i32 = arith.constant 0 : i32
    %c0_i32_0 = arith.constant 0 : i32
    return %arg0, %c0_i32 : i32, i32
  }
  func.func @transform_1(%arg0: i32, %arg1: i32) -> (i32, i32) {
    %c0_i32 = arith.constant 0 : i32
    %c0_i32_0 = arith.constant 0 : i32
    return %c0_i32, %arg1 : i32, i32
  }
  func.func @transform_2(%arg0: i32, %arg1: i32) -> (i32, i32) {
    %c0_i32 = arith.constant 0 : i32
    %c0_i32_0 = arith.constant 0 : i32
    return %c0_i32, %arg1 : i32, i32
  }
  func.func @transform_3(%arg0: i32, %arg1: i32) -> (i32, i32) {
    %c0_i32 = arith.constant 0 : i32
    %c0_i32_0 = arith.constant 0 : i32
    return %c0_i32, %arg1 : i32, i32
  }
  func.func @transform_4(%arg0: i32, %arg1: i32) -> (i32, i32) {
    %c0_i32 = arith.constant 0 : i32
    return %arg0, %arg1 : i32, i32
  }
}

module attributes {stable_mosaic.version = 11 : i64} {
  func.func @kernel(%arg0: i32, %arg1: i32, %arg2: memref<8x128xf32, #tpu.memory_space<vmem>>, %arg3: memref<128x128xf32, #tpu.memory_space<vmem>>, %arg4: memref<1x128xf32, #tpu.memory_space<vmem>>, %arg5: memref<1x128xf32, #tpu.memory_space<vmem>>, %arg6: memref<8x128xf32, #tpu.memory_space<vmem>>) attributes {dimension_semantics = [#tpu.dimension_semantics<parallel>, #tpu.dimension_semantics<parallel>], iteration_bounds = array<i64: 2, 1>, scalar_prefetch = 0 : i64, scratch_operands = 0 : i64, tpu.core_type = #tpu.core_type<tc>, window_params = [{transform_indices = @transform_0, window_bounds = array<i64: 8, 128>}, {transform_indices = @transform_1, window_bounds = array<i64: 128, 128>}, {transform_indices = @transform_2, window_bounds = array<i64: 1, 128>}, {transform_indices = @transform_3, window_bounds = array<i64: 1, 128>}, {transform_indices = @transform_4, window_bounds = array<i64: 8, 128>}]} {
    %c0 = arith.constant 0 : index
    %c0_0 = arith.constant 0 : index
    %0 = vector.load %arg2[%c0, %c0_0] : memref<8x128xf32, #tpu.memory_space<vmem>>, vector<8x128xf32>
    %c0_1 = arith.constant 0 : index
    %c0_2 = arith.constant 0 : index
    %1 = vector.load %arg3[%c0_1, %c0_2] : memref<128x128xf32, #tpu.memory_space<vmem>>, vector<128x128xf32>
    %cst = arith.constant dense<0.000000e+00> : vector<8x128xf32>
    %2 = tpu.matmul %0, %1, %cst {dimension_numbers = #tpu.dot_dimension_numbers<[1], [0], [0], [1], [0, 0, 1, 1], [], []>} : vector<8x128xf32>, vector<128x128xf32>, vector<8x128xf32> -> vector<8x128xf32>
    %3 = arith.mulf %0, %0 : vector<8x128xf32>
    %cst_3 = arith.constant dense<0.000000e+00> : vector<8xf32>
    %4 = vector.multi_reduction <add>, %3, %cst_3 [1] : vector<8x128xf32> to vector<8xf32>
    %5 = vector.shape_cast %4 : vector<8xf32> to vector<8x1xf32>
    %c0_4 = arith.constant 0 : index
    %c0_5 = arith.constant 0 : index
    %6 = vector.load %arg4[%c0_4, %c0_5] : memref<1x128xf32, #tpu.memory_space<vmem>>, vector<1x128xf32>
    %7 = vector.broadcast %5 : vector<8x1xf32> to vector<8x128xf32>
    %8 = vector.broadcast %6 : vector<1x128xf32> to vector<8x128xf32>
    %9 = arith.addf %7, %8 : vector<8x128xf32>
    %cst_6 = arith.constant -5.000000e-01 : f32
    %10 = vector.broadcast %cst_6 : f32 to vector<8x128xf32>
    %11 = arith.mulf %10, %9 : vector<8x128xf32>
    %c0_7 = arith.constant 0 : index
    %c0_8 = arith.constant 0 : index
    %12 = vector.load %arg5[%c0_7, %c0_8] : memref<1x128xf32, #tpu.memory_space<vmem>>, vector<1x128xf32>
    %cst_9 = arith.constant 1.000000e+00 : f32
    %13 = vector.broadcast %cst_9 : f32 to vector<8x128xf32>
    %14 = arith.mulf %13, %2 : vector<8x128xf32>
    %15 = arith.addf %11, %14 : vector<8x128xf32>
    %16 = math.exp %15 : vector<8x128xf32>
    %17 = vector.broadcast %12 : vector<1x128xf32> to vector<8x128xf32>
    %18 = arith.mulf %17, %16 : vector<8x128xf32>
    %c0_10 = arith.constant 0 : index
    %c0_11 = arith.constant 0 : index
    %19 = vector.load %arg6[%c0_10, %c0_11] : memref<8x128xf32, #tpu.memory_space<vmem>>, vector<8x128xf32>
    tpu.vector_store %arg6[%c0_10, %c0_11], %18 {strides = array<i32>} : memref<8x128xf32, #tpu.memory_space<vmem>>, vector<8x128xf32>,
    return
  }
  func.func @transform_0(%arg0: i32, %arg1: i32) -> (i32, i32) {
    %c0_i32 = arith.constant 0 : i32
    %c0_i32_0 = arith.constant 0 : i32
    return %arg0, %c0_i32 : i32, i32
  }
  func.func @transform_1(%arg0: i32, %arg1: i32) -> (i32, i32) {
    %c0_i32 = arith.constant 0 : i32
    %c0_i32_0 = arith.constant 0 : i32
    return %c0_i32, %arg1 : i32, i32
  }
  func.func @transform_2(%arg0: i32, %arg1: i32) -> (i32, i32) {
    %c0_i32 = arith.constant 0 : i32
    %c0_i32_0 = arith.constant 0 : i32
    return %c0_i32, %arg1 : i32, i32
  }
  func.func @transform_3(%arg0: i32, %arg1: i32) -> (i32, i32) {
    %c0_i32 = arith.constant 0 : i32
    %c0_i32_0 = arith.constant 0 : i32
    return %c0_i32, %arg1 : i32, i32
  }
  func.func @transform_4(%arg0: i32, %arg1: i32) -> (i32, i32) {
    %c0_i32 = arith.constant 0 : i32
    return %arg0, %arg1 : i32, i32
  }
}

</mosaic_0001>

<llo_original>
// kernel: tpu_custom_call.1
$region0: #{tpu_custom_call.1}
  #allocation0 [shape = 'u32[]', space=smem, size = 0x4, offset = 0x4, fixed_abs, tag = 'smem constant byte address 0x4 - core index']
  #allocation1 [shape = 'u32[72,128]{1,0:T(1,128)}', space=vmem, size = 0x9000, scoped, tag = 'internal scratch']
  %s0 = inlined_call_operand.hbm [shape: f32[16,128], index: 0, kind: input, shape index: {}]
  %s1 = inlined_call_operand.hbm [shape: f32[128,128], index: 1, kind: input, shape index: {}]
  %s2 = inlined_call_operand.vmem [shape: f32[1,128], index: 2, kind: input, shape index: {}]
  %s3 = inlined_call_operand.vmem [shape: f32[1,128], index: 3, kind: input, shape index: {}]
  %s4 = inlined_call_operand.hbm [shape: f32[16,128], index: 4, kind: output, shape index: {}]
  %s5 = sld [smem:[#allocation0]]
  $region57: #{tpu_custom_call.1} parent=0
    _
  %s7 = ssub.s32 1, %s5
  %s8 = scalar_select 0, %s7, %s5
  $region1: #{tpu_custom_call.1} parent=0
    #allocation2 [shape = 'u8[8192]{0}', space=vmem, size = 0x2000, scoped, tag = 'input window, operand 0']
    #allocation3 [shape = 's32[2]{0}', space=sflag, size = 0x8, scoped, tag = 'scoped memory for tpu_custom_call.1']
    #allocation4 [shape = 's32[2]{0}', space=sflag, size = 0x8, scoped, tag = 'scoped memory for tpu_custom_call.1']
    #allocation5 [shape = 'u8[65536]{0}', space=vmem, size = 0x10000, scoped, tag = 'input window, operand 1, single buffered']
    #allocation6 [shape = 's32[1]{0}', space=sflag, size = 0x4, scoped, tag = 'scoped memory for tpu_custom_call.1']
    #allocation7 [shape = 'u8[8192]{0}', space=vmem, size = 0x2000, scoped, tag = 'output window, operand 0']
    %9 = vsyncpa [#allocation3], 0
    %s10 = scalar_lea.sflag [#allocation3], 1
    %11 = vsyncpa %s10, 0
    %12 = vsyncpa [#allocation6], 0
    %13 = vsyncpa [#allocation4], 0
    %s14 = scalar_lea.sflag [#allocation4], 1
    %15 = vsyncpa %s14, 0
    loop: start=0, step=1, limit=4
    $region2: #{tpu_custom_call.1} parent=1 // loop_pre_header
      _
    $region3: #{tpu_custom_call.1} parent=1 // loop_header
      %s17 = sphi 0, %s21
      %p18 = scmp.ge.s32.totalorder %s17, 4
      %s24 = sphi 0, %s36
      %s25 = sphi 0, %s32
      %s26 = sphi 0, %s24
      %s27 = sphi 0, %s25
      %s28 = sphi 0, %s26
      %s29 = sphi 0, %s27
      %s39 = sphi 0, %s41
      %s42 = sphi 0, %s39
      %s43 = sphi 0, %s42
      %s59 = sphi 0, %s43
      %s65 = sphi 0, %s67
      %s68 = sphi 0, %s65
      %s69 = sphi 0, %s68
      %s85 = sphi 0, %s69
      %s91 = sphi 0, %s93
      %s94 = sphi 0, %s91
      %s95 = sphi 0, %s94
      %s111 = sphi 0, %s95
      %s117 = sphi 0, %s119
      %s120 = sphi 0, %s117
      %s121 = sphi 0, %s120
      %s137 = sphi 0, %s121
      %s145 = sphi 0, %s147
      %s148 = sphi 0, %s145
      %s149 = sphi 0, %s148
      %s165 = sphi 0, %s149
    $region4: #{tpu_custom_call.1} parent=1 // loop_header_branch
      %20 = sbr.rel (%p18) target = $region8
    $region5: #{tpu_custom_call.1} parent=1 // loop_body
      %s22 = ssub.s32 %s17, 1
      %s23 = ssub.s32 %s17, 2
      %s30 = sadd.s32 1, %s25
      %p31 = scmp.ge.s32.totalorder %s30, 1
      %s32 = scalar_select %p31, 0, %s30
      %s33 = sadd.s32 1, %s24
      %s34 = scalar_select %p31, %s33, %s24
      %p35 = scmp.ge.s32.totalorder %s34, 2
      %s36 = scalar_select %p35, 0, %s34
      %s37 = ssub.s32 %s24, %s36
      %p38 = scmp.eq.s32.totalorder %s37, 0
      %s40 = sadd.s32 %s39, 1
      %s41 = scalar_select %p38, %s39, %s40
      %p44 = pneg %p38
      %p45 = scmp.eq.s32.totalorder %s17, 1
      %p46 = por %p44, %p45
      %p47 = scmp.ne.s32.totalorder %s39, %s42
      %p48 = scmp.eq.s32.totalorder %s17, 0
      %p49 = por %p47, %p48
      %p50 = scmp.ne.s32.totalorder %s39, %s42
      %p51 = scmp.eq.s32.totalorder %s22, 1
      %p52 = por %p50, %p51
      %p53 = scmp.ne.s32.totalorder %s42, %s43
      %p54 = scmp.eq.s32.totalorder %s22, 0
      %p55 = por %p53, %p54
      %p56 = scmp.ne.s32.totalorder %s42, %s43
      %p57 = scmp.eq.s32.totalorder %s23, 1
      %p58 = por %p56, %p57
      %p60 = scmp.ne.s32.totalorder %s43, %s59
      %p61 = scmp.eq.s32.totalorder %s23, 0
      %p62 = por %p60, %p61
      %s63 = ssub.s32 %s25, %s32
      %p64 = scmp.eq.s32.totalorder %s63, 0
      %s66 = sadd.s32 %s65, 1
      %s67 = scalar_select %p64, %s65, %s66
      %p70 = pneg %p64
      %p71 = scmp.eq.s32.totalorder %s17, 1
      %p72 = por %p70, %p71
      %p73 = scmp.ne.s32.totalorder %s65, %s68
      %p74 = scmp.eq.s32.totalorder %s17, 0
      %p75 = por %p73, %p74
      %p76 = scmp.ne.s32.totalorder %s65, %s68
      %p77 = scmp.eq.s32.totalorder %s22, 1
      %p78 = por %p76, %p77
      %p79 = scmp.ne.s32.totalorder %s68, %s69
      %p80 = scmp.eq.s32.totalorder %s22, 0
      %p81 = por %p79, %p80
      %p82 = scmp.ne.s32.totalorder %s68, %s69
      %p83 = scmp.eq.s32.totalorder %s23, 1
      %p84 = por %p82, %p83
      %p86 = scmp.ne.s32.totalorder %s69, %s85
      %p87 = scmp.eq.s32.totalorder %s23, 0
      %p88 = por %p86, %p87
      %s89 = ssub.s32 %s25, %s32
      %p90 = scmp.eq.s32.totalorder %s89, 0
      %s92 = sadd.s32 %s91, 1
      %s93 = scalar_select %p90, %s91, %s92
      %p96 = pneg %p90
      %p97 = scmp.eq.s32.totalorder %s17, 1
      %p98 = por %p96, %p97
      %p99 = scmp.ne.s32.totalorder %s91, %s94
      %p100 = scmp.eq.s32.totalorder %s17, 0
      %p101 = por %p99, %p100
      %p102 = scmp.ne.s32.totalorder %s91, %s94
      %p103 = scmp.eq.s32.totalorder %s22, 1
      %p104 = por %p102, %p103
      %p105 = scmp.ne.s32.totalorder %s94, %s95
      %p106 = scmp.eq.s32.totalorder %s22, 0
      %p107 = por %p105, %p106
      %p108 = scmp.ne.s32.totalorder %s94, %s95
      %p109 = scmp.eq.s32.totalorder %s23, 1
      %p110 = por %p108, %p109
      %p112 = scmp.ne.s32.totalorder %s95, %s111
      %p113 = scmp.eq.s32.totalorder %s23, 0
      %p114 = por %p112, %p113
      %s115 = ssub.s32 %s25, %s32
      %p116 = scmp.eq.s32.totalorder %s115, 0
      %s118 = sadd.s32 %s117, 1
      %s119 = scalar_select %p116, %s117, %s118
      %p122 = pneg %p116
      %p123 = scmp.eq.s32.totalorder %s17, 1
      %p124 = por %p122, %p123
      %p125 = scmp.ne.s32.totalorder %s117, %s120
      %p126 = scmp.eq.s32.totalorder %s17, 0
      %p127 = por %p125, %p126
      %p128 = scmp.ne.s32.totalorder %s117, %s120
      %p129 = scmp.eq.s32.totalorder %s22, 1
      %p130 = por %p128, %p129
      %p131 = scmp.ne.s32.totalorder %s120, %s121
      %p132 = scmp.eq.s32.totalorder %s22, 0
      %p133 = por %p131, %p132
      %p134 = scmp.ne.s32.totalorder %s120, %s121
      %p135 = scmp.eq.s32.totalorder %s23, 1
      %p136 = por %p134, %p135
      %p138 = scmp.ne.s32.totalorder %s121, %s137
      %p139 = scmp.eq.s32.totalorder %s23, 0
      %p140 = por %p138, %p139
      %s141 = ssub.s32 %s24, %s36
      %s142 = ssub.s32 %s25, %s32
      %s143 = sor.u32 %s141, %s142
      %p144 = scmp.eq.s32.totalorder %s143, 0
      %s146 = sadd.s32 %s145, 1
      %s147 = scalar_select %p144, %s145, %s146
      %p150 = pneg %p144
      %p151 = scmp.eq.s32.totalorder %s17, 1
      %p152 = por %p150, %p151
      %p153 = scmp.ne.s32.totalorder %s145, %s148
      %p154 = scmp.eq.s32.totalorder %s17, 0
      %p155 = por %p153, %p154
      %p156 = scmp.ne.s32.totalorder %s145, %s148
      %p157 = scmp.eq.s32.totalorder %s22, 1
      %p158 = por %p156, %p157
      %p159 = scmp.ne.s32.totalorder %s148, %s149
      %p160 = scmp.eq.s32.totalorder %s22, 0
      %p161 = por %p159, %p160
      %p162 = scmp.ne.s32.totalorder %s148, %s149
      %p163 = scmp.eq.s32.totalorder %s23, 1
      %p164 = por %p162, %p163
      %p166 = scmp.ne.s32.totalorder %s149, %s165
      %p167 = scmp.eq.s32.totalorder %s23, 0
      %p168 = por %p166, %p167
      %p169 = scmp.le.s32.totalorder 1, %s17
      %p170 = scmp.lt.s32.totalorder %s17, 3
      %p171 = pnand %p169, %p170
      %p172 = pneg %p171
      // Predicated region
      $region9: #{tpu_custom_call.1} parent=5 // pred_check
        _
      $region10: #{tpu_custom_call.1} parent=5 // pred_check_branch
        %174 = sbr.rel (%p171) target = $region12
      $region11: #{tpu_custom_call.1} parent=5 // pred_region
        %s175 = ssub.s32 %s17, 1
        // Predicated region
        $region13: #{tpu_custom_call.1} parent=11 // pred_check
          %p176 = pneg %p81
        $region14: #{tpu_custom_call.1} parent=11 // pred_check_branch
          %178 = sbr.rel (%p176) target = $region16
        $region15: #{tpu_custom_call.1} parent=11 // pred_region
          %180 = vsyncadd [#allocation6], 0
          %s181 = smul.addr %s27, 8
          %s182 = scalar_lea.hbm %s1, %s181
          %s183 = sshll.u32 %s182, 4
          %s184 = int_to_ptr.hbm [resolvable:$true] %s183
          %s185 = sshll.u32 [#allocation5], 4
          %s186 = int_to_ptr.vmem [resolvable:$true] %s185
          %191 = dma.hbm_to_vmem [thread:$0]  %s184, 2048, %s186, [#allocation6], 128, 128, 8
        $region16: #{tpu_custom_call.1} parent=11 // pred_fallthru
          _
        // Predicated region
        $region17: #{tpu_custom_call.1} parent=11 // pred_check
          %p192 = pneg %p107
        $region18: #{tpu_custom_call.1} parent=11 // pred_check_branch
          %194 = sbr.rel (%p192) target = $region20
        $region19: #{tpu_custom_call.1} parent=11 // pred_region
          %p195 = scmp.lt.s32.totalorder %s27, 0
          %s196 = scalar_select %p195, %s27, 0
          %s197 = scalar_lea.vmem %s2, %s196
        $region20: #{tpu_custom_call.1} parent=11 // pred_fallthru
          _
        // Predicated region
        $region21: #{tpu_custom_call.1} parent=11 // pred_check
          %p198 = pneg %p133
        $region22: #{tpu_custom_call.1} parent=11 // pred_check_branch
          %200 = sbr.rel (%p198) target = $region24
        $region23: #{tpu_custom_call.1} parent=11 // pred_region
          %p201 = scmp.lt.s32.totalorder %s27, 0
          %s202 = scalar_select %p201, %s27, 0
          %s203 = scalar_lea.vmem %s3, %s202
        $region24: #{tpu_custom_call.1} parent=11 // pred_fallthru
          _
      $region12: #{tpu_custom_call.1} parent=5 // pred_fallthru
        _
      %p204 = scmp.lt.s32.totalorder %s17, 2
      // Predicated region
      $region25: #{tpu_custom_call.1} parent=5 // pred_check
        %p205 = pneg %p204
      $region26: #{tpu_custom_call.1} parent=5 // pred_check_branch
        %207 = sbr.rel (%p205) target = $region28
      $region27: #{tpu_custom_call.1} parent=5 // pred_region
        // Predicated region
        $region29: #{tpu_custom_call.1} parent=27 // pred_check
          %p208 = pneg %p49
        $region30: #{tpu_custom_call.1} parent=27 // pred_check_branch
          %210 = sbr.rel (%p208) target = $region32
        $region31: #{tpu_custom_call.1} parent=27 // pred_region
          %s211 = sand.u32 %s39, 1
          %s212 = scalar_lea.sflag [#allocation3], %s211
          %s213 = sand.u32 %s39, 1
          %s214 = smul.addr %s213, 8
          %s215 = scalar_lea.vmem [#allocation2], %s214
          %217 = vsyncadd %s212, 0
          %s218 = smul.addr %s24, 8
          %s219 = scalar_lea.hbm %s0, %s218
          %s221 = sshll.u32 %s219, 4
          %s222 = int_to_ptr.hbm [resolvable:$true] %s221
          %s223 = sshll.u32 %s215, 4
          %s224 = int_to_ptr.vmem [resolvable:$true] %s223
          %226 = dma.hbm_to_vmem [thread:$0]  %s222, 128, %s224, %s212
        $region32: #{tpu_custom_call.1} parent=27 // pred_fallthru
          _
      $region28: #{tpu_custom_call.1} parent=5 // pred_fallthru
        _
      %p227 = scmp.le.s32.totalorder 1, %s17
      %p228 = scmp.lt.s32.totalorder %s17, 3
      %p229 = pnand %p227, %p228
      %p230 = pneg %p229
      // Predicated region
      $region33: #{tpu_custom_call.1} parent=5 // pred_check
        _
      $region34: #{tpu_custom_call.1} parent=5 // pred_check_branch
        %232 = sbr.rel (%p229) target = $region36
      $region35: #{tpu_custom_call.1} parent=5 // pred_region
        %s233 = ssub.s32 %s17, 1
        %s234 = sand.u32 %s42, 1
        %s235 = scalar_lea.sflag [#allocation3], %s234
        %s236 = sand.u32 %s42, 1
        %s237 = smul.addr %s236, 8
        %s238 = scalar_lea.vmem [#allocation2], %s237
        // Predicated region
        $region37: #{tpu_custom_call.1} parent=35 // pred_check
          %p239 = pneg %p55
        $region38: #{tpu_custom_call.1} parent=35 // pred_check_branch
          %241 = sbr.rel (%p239) target = $region40
        $region39: #{tpu_custom_call.1} parent=35 // pred_region
          %243 = dma.done %s235, 128
        $region40: #{tpu_custom_call.1} parent=35 // pred_fallthru
          _
        // Predicated region
        $region41: #{tpu_custom_call.1} parent=35 // pred_check
          %p244 = pneg %p81
        $region42: #{tpu_custom_call.1} parent=35 // pred_check_branch
          %246 = sbr.rel (%p244) target = $region44
        $region43: #{tpu_custom_call.1} parent=35 // pred_region
          %248 = dma.done [#allocation6], 2048
        $region44: #{tpu_custom_call.1} parent=35 // pred_fallthru
          _
        %s249 = sand.u32 %s42, 1
        %s250 = scalar_lea.sflag [#allocation3], %s249
        %s251 = sand.u32 %s42, 1
        %s252 = smul.addr %s251, 8
        %s253 = scalar_lea.vmem [#allocation2], %s252
        %p254 = pneg %p55
        %p255 = pneg %p52
        %p256 = pneg %p81
        %p257 = pneg %p78
        %p258 = scmp.lt.s32.totalorder %s27, 0
        %s259 = scalar_select %p258, %s27, 0
        %s260 = scalar_lea.vmem %s2, %s259
        %p261 = pneg %p107
        %p262 = pneg %p104
        %p263 = scmp.lt.s32.totalorder %s27, 0
        %s264 = scalar_select %p263, %s27, 0
        %s265 = scalar_lea.vmem %s3, %s264
        %p266 = pneg %p133
        %p267 = pneg %p130
        %p268 = pneg %p161
        %p269 = pneg %p158
        %s270 = sand.u32 %s148, 1
        %s271 = scalar_lea.sflag [#allocation4], %s270
        %s272 = sand.u32 %s148, 1
        %s273 = smul.addr %s272, 8
        %s274 = scalar_lea.vmem [#allocation7], %s273
        %p275 = scmp.lt.s32.totalorder %s27, 0
        %s276 = scalar_select %p275, %s27, 0
        %s277 = scalar_lea.vmem %s2, %s276
        %p278 = scmp.lt.s32.totalorder %s27, 0
        %s279 = scalar_select %p278, %s27, 0
        %s280 = scalar_lea.vmem %s3, %s279
        %v281 = vld [vmem:[%s238] sm:$0xff]
        %v282 = vld [vmem:[#allocation5] sm:$0xff]
        %v283 = vld [vmem:[#allocation5 + $0x8] sm:$0xff]
        %v284 = vld [vmem:[#allocation5 + $0x10] sm:$0xff]
        %v285 = vld [vmem:[#allocation5 + $0x18] sm:$0xff]
        %v286 = vld [vmem:[#allocation5 + $0x20] sm:$0xff]
        %v287 = vld [vmem:[#allocation5 + $0x28] sm:$0xff]
        %v288 = vld [vmem:[#allocation5 + $0x30] sm:$0xff]
        %v289 = vld [vmem:[#allocation5 + $0x38] sm:$0xff]
        %v290 = vld [vmem:[#allocation5 + $0x40] sm:$0xff]
        %v291 = vld [vmem:[#allocation5 + $0x48] sm:$0xff]
        %v292 = vld [vmem:[#allocation5 + $0x50] sm:$0xff]
        %v293 = vld [vmem:[#allocation5 + $0x58] sm:$0xff]
        %v294 = vld [vmem:[#allocation5 + $0x60] sm:$0xff]
        %v295 = vld [vmem:[#allocation5 + $0x68] sm:$0xff]
        %v296 = vld [vmem:[#allocation5 + $0x70] sm:$0xff]
        %v297 = vld [vmem:[#allocation5 + $0x78] sm:$0xff]
        %298 = vmatpush.msra.mxu0 %v297
        %299 = vmatpush.msra.mxu0 %v296
        %300 = vmatpush.msra.mxu0 %v295
        %301 = vmatpush.msra.mxu0 %v294
        %302 = vmatpush.msra.mxu0 %v293
        %303 = vmatpush.msra.mxu0 %v292
        %304 = vmatpush.msra.mxu0 %v291
        %305 = vmatpush.msra.mxu0 %v290
        %306 = vmatpush.msra.mxu0 %v289
        %307 = vmatpush.msra.mxu0 %v288
        %308 = vmatpush.msra.mxu0 %v287
        %309 = vmatpush.msra.mxu0 %v286
        %310 = vmatpush.msra.mxu0 %v285
        %311 = vmatpush.msra.mxu0 %v284
        %312 = vmatpush.msra.mxu0 %v283
        %313 = vmatpush.msra.mxu0 %v282
        %314 = vmatmul.f32.gmra.mxu0 %v281
        %v315 = vpop.f32.mrf.mxu0
        %v316 = vadd.f32 0.0, %v315
        %317 = vdwg.mxu0
        %v318 = vmul.f32 %v281, %v281
        %319 = vadd.xlane.f32.xlu0 %v318
        %v320 = vpop.xlane.xlu0 %319
        %v321 = vld [vmem:[%s277] sm:$0x1]
        %v323 = vperm.slane %v321, 0
        %v325 = vadd.f32 %v320, %v323
        %v326 = vmul.f32 %v325, -0.5
        %v327 = vld [vmem:[%s280] sm:$0x1]
        %v328 = vadd.f32 %v326, %v316
        %v329 = vmul.f32 %v328, 1.442695
        %v330 = vpow.pop %v329
        %v332 = vperm.slane %v327, 0
        %v334 = vmul.f32 %v332, %v330
        %335 = vst [vmem:[%s274] sm:$0xff] %v334
        %s336 = sand.u32 %s148, 1
        %s337 = scalar_lea.sflag [#allocation4], %s336
        %s338 = sand.u32 %s148, 1
        %s339 = smul.addr %s338, 8
        %s340 = scalar_lea.vmem [#allocation7], %s339
        // Predicated region
        $region45: #{tpu_custom_call.1} parent=35 // pred_check
          %p341 = pneg %p158
        $region46: #{tpu_custom_call.1} parent=35 // pred_check_branch
          %343 = sbr.rel (%p341) target = $region48
        $region47: #{tpu_custom_call.1} parent=35 // pred_region
          %345 = vsyncadd %s337, 0
          %s346 = sadd.s32 %s27, %s26
          %s347 = smul.addr %s346, 8
          %s348 = scalar_lea.hbm %s4, %s347
          %s350 = sshll.u32 %s340, 4
          %s351 = int_to_ptr.vmem [resolvable:$true] %s350
          %s352 = sshll.u32 %s348, 4
          %s353 = int_to_ptr.hbm [resolvable:$true] %s352
          %355 = dma.vmem_to_hbm [thread:$0]  %s351, 128, %s353, %s337
        $region48: #{tpu_custom_call.1} parent=35 // pred_fallthru
          _
      $region36: #{tpu_custom_call.1} parent=5 // pred_fallthru
        _
      %p356 = scmp.le.s32.totalorder 2, %s17
      // Predicated region
      $region49: #{tpu_custom_call.1} parent=5 // pred_check
        %p357 = pneg %p356
      $region50: #{tpu_custom_call.1} parent=5 // pred_check_branch
        %359 = sbr.rel (%p357) target = $region52
      $region51: #{tpu_custom_call.1} parent=5 // pred_region
        %s360 = ssub.s32 %s17, 2
        // Predicated region
        $region53: #{tpu_custom_call.1} parent=51 // pred_check
          %p361 = pneg %p164
        $region54: #{tpu_custom_call.1} parent=51 // pred_check_branch
          %363 = sbr.rel (%p361) target = $region56
        $region55: #{tpu_custom_call.1} parent=51 // pred_region
          %s364 = sand.u32 %s149, 1
          %s365 = scalar_lea.sflag [#allocation4], %s364
          %s366 = sand.u32 %s149, 1
          %s367 = smul.addr %s366, 8
          %s368 = scalar_lea.vmem [#allocation7], %s367
          %370 = dma.done %s365, 128
        $region56: #{tpu_custom_call.1} parent=51 // pred_fallthru
          _
      $region52: #{tpu_custom_call.1} parent=5 // pred_fallthru
        _
    $region6: #{tpu_custom_call.1} parent=1 // loop_footer
      %s21 = sadd.s32 1, %s17
    $region7: #{tpu_custom_call.1} parent=1 // loop_footer_branch
      %16 = sbr.rel target = $region3
    $region8: #{tpu_custom_call.1} parent=1 // loop_exit
      _
    %371 = vsyncpa [#allocation3], 1
    %s372 = scalar_lea.sflag [#allocation3], 1
    %373 = vsyncpa %s372, 1
    %374 = vsyncpa [#allocation6], 1
    %375 = vsyncpa [#allocation4], 1
    %s376 = scalar_lea.sflag [#allocation4], 1
    %377 = vsyncpa %s376, 1

// kernel: tpu_custom_call.1
$region0: #{tpu_custom_call.1}
  #allocation0 [shape = 'u32[]', space=smem, size = 0x4, offset = 0x4, fixed_abs, tag = 'smem constant byte address 0x4 - core index']
  #allocation1 [shape = 'u32[72,128]{1,0:T(1,128)}', space=vmem, size = 0x9000, scoped, tag = 'internal scratch']
  %s0 = inlined_call_operand.hbm [shape: f32[16,128], index: 0, kind: input, shape index: {}]
  %s1 = inlined_call_operand.hbm [shape: f32[128,128], index: 1, kind: input, shape index: {}]
  %s2 = inlined_call_operand.vmem [shape: f32[1,128], index: 2, kind: input, shape index: {}]
  %s3 = inlined_call_operand.vmem [shape: f32[1,128], index: 3, kind: input, shape index: {}]
  %s4 = inlined_call_operand.hbm [shape: f32[16,128], index: 4, kind: output, shape index: {}]
  %s5 = sld [smem:[#allocation0]]
  $region57: #{tpu_custom_call.1} parent=0
    _
  %s7 = ssub.s32 1, %s5
  %s8 = scalar_select 0, %s7, %s5
  $region1: #{tpu_custom_call.1} parent=0
    #allocation2 [shape = 'u8[8192]{0}', space=vmem, size = 0x2000, scoped, tag = 'input window, operand 0']
    #allocation3 [shape = 's32[2]{0}', space=sflag, size = 0x8, scoped, tag = 'scoped memory for tpu_custom_call.1']
    #allocation4 [shape = 's32[2]{0}', space=sflag, size = 0x8, scoped, tag = 'scoped memory for tpu_custom_call.1']
    #allocation5 [shape = 'u8[65536]{0}', space=vmem, size = 0x10000, scoped, tag = 'input window, operand 1, single buffered']
    #allocation6 [shape = 's32[1]{0}', space=sflag, size = 0x4, scoped, tag = 'scoped memory for tpu_custom_call.1']
    #allocation7 [shape = 'u8[8192]{0}', space=vmem, size = 0x2000, scoped, tag = 'output window, operand 0']
    %9 = vsyncpa [#allocation3], 0
    %s10 = scalar_lea.sflag [#allocation3], 1
    %11 = vsyncpa %s10, 0
    %12 = vsyncpa [#allocation6], 0
    %13 = vsyncpa [#allocation4], 0
    %s14 = scalar_lea.sflag [#allocation4], 1
    %15 = vsyncpa %s14, 0
    loop: start=0, step=1, limit=4
    $region2: #{tpu_custom_call.1} parent=1 // loop_pre_header
      _
    $region3: #{tpu_custom_call.1} parent=1 // loop_header
      %s17 = sphi 0, %s21
      %p18 = scmp.ge.s32.totalorder %s17, 4
      %s24 = sphi 0, %s36
      %s25 = sphi 0, %s32
      %s26 = sphi 0, %s24
      %s27 = sphi 0, %s25
      %s28 = sphi 0, %s26
      %s29 = sphi 0, %s27
      %s39 = sphi 0, %s41
      %s42 = sphi 0, %s39
      %s43 = sphi 0, %s42
      %s59 = sphi 0, %s43
      %s65 = sphi 0, %s67
      %s68 = sphi 0, %s65
      %s69 = sphi 0, %s68
      %s85 = sphi 0, %s69
      %s91 = sphi 0, %s93
      %s94 = sphi 0, %s91
      %s95 = sphi 0, %s94
      %s111 = sphi 0, %s95
      %s117 = sphi 0, %s119
      %s120 = sphi 0, %s117
      %s121 = sphi 0, %s120
      %s137 = sphi 0, %s121
      %s145 = sphi 0, %s147
      %s148 = sphi 0, %s145
      %s149 = sphi 0, %s148
      %s165 = sphi 0, %s149
    $region4: #{tpu_custom_call.1} parent=1 // loop_header_branch
      %20 = sbr.rel (%p18) target = $region8
    $region5: #{tpu_custom_call.1} parent=1 // loop_body
      %s22 = ssub.s32 %s17, 1
      %s23 = ssub.s32 %s17, 2
      %s30 = sadd.s32 1, %s25
      %p31 = scmp.ge.s32.totalorder %s30, 1
      %s32 = scalar_select %p31, 0, %s30
      %s33 = sadd.s32 1, %s24
      %s34 = scalar_select %p31, %s33, %s24
      %p35 = scmp.ge.s32.totalorder %s34, 2
      %s36 = scalar_select %p35, 0, %s34
      %s37 = ssub.s32 %s24, %s36
      %p38 = scmp.eq.s32.totalorder %s37, 0
      %s40 = sadd.s32 %s39, 1
      %s41 = scalar_select %p38, %s39, %s40
      %p44 = pneg %p38
      %p45 = scmp.eq.s32.totalorder %s17, 1
      %p46 = por %p44, %p45
      %p47 = scmp.ne.s32.totalorder %s39, %s42
      %p48 = scmp.eq.s32.totalorder %s17, 0
      %p49 = por %p47, %p48
      %p50 = scmp.ne.s32.totalorder %s39, %s42
      %p51 = scmp.eq.s32.totalorder %s22, 1
      %p52 = por %p50, %p51
      %p53 = scmp.ne.s32.totalorder %s42, %s43
      %p54 = scmp.eq.s32.totalorder %s22, 0
      %p55 = por %p53, %p54
      %p56 = scmp.ne.s32.totalorder %s42, %s43
      %p57 = scmp.eq.s32.totalorder %s23, 1
      %p58 = por %p56, %p57
      %p60 = scmp.ne.s32.totalorder %s43, %s59
      %p61 = scmp.eq.s32.totalorder %s23, 0
      %p62 = por %p60, %p61
      %s63 = ssub.s32 %s25, %s32
      %p64 = scmp.eq.s32.totalorder %s63, 0
      %s66 = sadd.s32 %s65, 1
      %s67 = scalar_select %p64, %s65, %s66
      %p70 = pneg %p64
      %p71 = scmp.eq.s32.totalorder %s17, 1
      %p72 = por %p70, %p71
      %p73 = scmp.ne.s32.totalorder %s65, %s68
      %p74 = scmp.eq.s32.totalorder %s17, 0
      %p75 = por %p73, %p74
      %p76 = scmp.ne.s32.totalorder %s65, %s68
      %p77 = scmp.eq.s32.totalorder %s22, 1
      %p78 = por %p76, %p77
      %p79 = scmp.ne.s32.totalorder %s68, %s69
      %p80 = scmp.eq.s32.totalorder %s22, 0
      %p81 = por %p79, %p80
      %p82 = scmp.ne.s32.totalorder %s68, %s69
      %p83 = scmp.eq.s32.totalorder %s23, 1
      %p84 = por %p82, %p83
      %p86 = scmp.ne.s32.totalorder %s69, %s85
      %p87 = scmp.eq.s32.totalorder %s23, 0
      %p88 = por %p86, %p87
      %s89 = ssub.s32 %s25, %s32
      %p90 = scmp.eq.s32.totalorder %s89, 0
      %s92 = sadd.s32 %s91, 1
      %s93 = scalar_select %p90, %s91, %s92
      %p96 = pneg %p90
      %p97 = scmp.eq.s32.totalorder %s17, 1
      %p98 = por %p96, %p97
      %p99 = scmp.ne.s32.totalorder %s91, %s94
      %p100 = scmp.eq.s32.totalorder %s17, 0
      %p101 = por %p99, %p100
      %p102 = scmp.ne.s32.totalorder %s91, %s94
      %p103 = scmp.eq.s32.totalorder %s22, 1
      %p104 = por %p102, %p103
      %p105 = scmp.ne.s32.totalorder %s94, %s95
      %p106 = scmp.eq.s32.totalorder %s22, 0
      %p107 = por %p105, %p106
      %p108 = scmp.ne.s32.totalorder %s94, %s95
      %p109 = scmp.eq.s32.totalorder %s23, 1
      %p110 = por %p108, %p109
      %p112 = scmp.ne.s32.totalorder %s95, %s111
      %p113 = scmp.eq.s32.totalorder %s23, 0
      %p114 = por %p112, %p113
      %s115 = ssub.s32 %s25, %s32
      %p116 = scmp.eq.s32.totalorder %s115, 0
      %s118 = sadd.s32 %s117, 1
      %s119 = scalar_select %p116, %s117, %s118
      %p122 = pneg %p116
      %p123 = scmp.eq.s32.totalorder %s17, 1
      %p124 = por %p122, %p123
      %p125 = scmp.ne.s32.totalorder %s117, %s120
      %p126 = scmp.eq.s32.totalorder %s17, 0
      %p127 = por %p125, %p126
      %p128 = scmp.ne.s32.totalorder %s117, %s120
      %p129 = scmp.eq.s32.totalorder %s22, 1
      %p130 = por %p128, %p129
      %p131 = scmp.ne.s32.totalorder %s120, %s121
      %p132 = scmp.eq.s32.totalorder %s22, 0
      %p133 = por %p131, %p132
      %p134 = scmp.ne.s32.totalorder %s120, %s121
      %p135 = scmp.eq.s32.totalorder %s23, 1
      %p136 = por %p134, %p135
      %p138 = scmp.ne.s32.totalorder %s121, %s137
      %p139 = scmp.eq.s32.totalorder %s23, 0
      %p140 = por %p138, %p139
      %s141 = ssub.s32 %s24, %s36
      %s142 = ssub.s32 %s25, %s32
      %s143 = sor.u32 %s141, %s142
      %p144 = scmp.eq.s32.totalorder %s143, 0
      %s146 = sadd.s32 %s145, 1
      %s147 = scalar_select %p144, %s145, %s146
      %p150 = pneg %p144
      %p151 = scmp.eq.s32.totalorder %s17, 1
      %p152 = por %p150, %p151
      %p153 = scmp.ne.s32.totalorder %s145, %s148
      %p154 = scmp.eq.s32.totalorder %s17, 0
      %p155 = por %p153, %p154
      %p156 = scmp.ne.s32.totalorder %s145, %s148
      %p157 = scmp.eq.s32.totalorder %s22, 1
      %p158 = por %p156, %p157
      %p159 = scmp.ne.s32.totalorder %s148, %s149
      %p160 = scmp.eq.s32.totalorder %s22, 0
      %p161 = por %p159, %p160
      %p162 = scmp.ne.s32.totalorder %s148, %s149
      %p163 = scmp.eq.s32.totalorder %s23, 1
      %p164 = por %p162, %p163
      %p166 = scmp.ne.s32.totalorder %s149, %s165
      %p167 = scmp.eq.s32.totalorder %s23, 0
      %p168 = por %p166, %p167
      %p169 = scmp.le.s32.totalorder 1, %s17
      %p170 = scmp.lt.s32.totalorder %s17, 3
      %p171 = pnand %p169, %p170
      %p172 = pneg %p171
      // Predicated region
      $region9: #{tpu_custom_call.1} parent=5 // pred_check
        _
      $region10: #{tpu_custom_call.1} parent=5 // pred_check_branch
        %174 = sbr.rel (%p171) target = $region12
      $region11: #{tpu_custom_call.1} parent=5 // pred_region
        %s175 = ssub.s32 %s17, 1
        // Predicated region
        $region13: #{tpu_custom_call.1} parent=11 // pred_check
          %p176 = pneg %p81
        $region14: #{tpu_custom_call.1} parent=11 // pred_check_branch
          %178 = sbr.rel (%p176) target = $region16
        $region15: #{tpu_custom_call.1} parent=11 // pred_region
          %180 = vsyncadd [#allocation6], 0
          %s181 = smul.addr %s27, 8
          %s182 = scalar_lea.hbm %s1, %s181
          %s183 = sshll.u32 %s182, 4
          %s184 = int_to_ptr.hbm [resolvable:$true] %s183
          %s185 = sshll.u32 [#allocation5], 4
          %s186 = int_to_ptr.vmem [resolvable:$true] %s185
          %191 = dma.hbm_to_vmem [thread:$0]  %s184, 2048, %s186, [#allocation6], 128, 128, 8
        $region16: #{tpu_custom_call.1} parent=11 // pred_fallthru
          _
        // Predicated region
        $region17: #{tpu_custom_call.1} parent=11 // pred_check
          %p192 = pneg %p107
        $region18: #{tpu_custom_call.1} parent=11 // pred_check_branch
          %194 = sbr.rel (%p192) target = $region20
        $region19: #{tpu_custom_call.1} parent=11 // pred_region
          %p195 = scmp.lt.s32.totalorder %s27, 0
          %s196 = scalar_select %p195, %s27, 0
          %s197 = scalar_lea.vmem %s2, %s196
        $region20: #{tpu_custom_call.1} parent=11 // pred_fallthru
          _
        // Predicated region
        $region21: #{tpu_custom_call.1} parent=11 // pred_check
          %p198 = pneg %p133
        $region22: #{tpu_custom_call.1} parent=11 // pred_check_branch
          %200 = sbr.rel (%p198) target = $region24
        $region23: #{tpu_custom_call.1} parent=11 // pred_region
          %p201 = scmp.lt.s32.totalorder %s27, 0
          %s202 = scalar_select %p201, %s27, 0
          %s203 = scalar_lea.vmem %s3, %s202
        $region24: #{tpu_custom_call.1} parent=11 // pred_fallthru
          _
      $region12: #{tpu_custom_call.1} parent=5 // pred_fallthru
        _
      %p204 = scmp.lt.s32.totalorder %s17, 2
      // Predicated region
      $region25: #{tpu_custom_call.1} parent=5 // pred_check
        %p205 = pneg %p204
      $region26: #{tpu_custom_call.1} parent=5 // pred_check_branch
        %207 = sbr.rel (%p205) target = $region28
      $region27: #{tpu_custom_call.1} parent=5 // pred_region
        // Predicated region
        $region29: #{tpu_custom_call.1} parent=27 // pred_check
          %p208 = pneg %p49
        $region30: #{tpu_custom_call.1} parent=27 // pred_check_branch
          %210 = sbr.rel (%p208) target = $region32
        $region31: #{tpu_custom_call.1} parent=27 // pred_region
          %s211 = sand.u32 %s39, 1
          %s212 = scalar_lea.sflag [#allocation3], %s211
          %s213 = sand.u32 %s39, 1
          %s214 = smul.addr %s213, 8
          %s215 = scalar_lea.vmem [#allocation2], %s214
          %217 = vsyncadd %s212, 0
          %s218 = smul.addr %s24, 8
          %s219 = scalar_lea.hbm %s0, %s218
          %s221 = sshll.u32 %s219, 4
          %s222 = int_to_ptr.hbm [resolvable:$true] %s221
          %s223 = sshll.u32 %s215, 4
          %s224 = int_to_ptr.vmem [resolvable:$true] %s223
          %226 = dma.hbm_to_vmem [thread:$0]  %s222, 128, %s224, %s212
        $region32: #{tpu_custom_call.1} parent=27 // pred_fallthru
          _
      $region28: #{tpu_custom_call.1} parent=5 // pred_fallthru
        _
      %p227 = scmp.le.s32.totalorder 1, %s17
      %p228 = scmp.lt.s32.totalorder %s17, 3
      %p229 = pnand %p227, %p228
      %p230 = pneg %p229
      // Predicated region
      $region33: #{tpu_custom_call.1} parent=5 // pred_check
        _
      $region34: #{tpu_custom_call.1} parent=5 // pred_check_branch
        %232 = sbr.rel (%p229) target = $region36
      $region35: #{tpu_custom_call.1} parent=5 // pred_region
        %s233 = ssub.s32 %s17, 1
        %s234 = sand.u32 %s42, 1
        %s235 = scalar_lea.sflag [#allocation3], %s234
        %s236 = sand.u32 %s42, 1
        %s237 = smul.addr %s236, 8
        %s238 = scalar_lea.vmem [#allocation2], %s237
        // Predicated region
        $region37: #{tpu_custom_call.1} parent=35 // pred_check
          %p239 = pneg %p55
        $region38: #{tpu_custom_call.1} parent=35 // pred_check_branch
          %241 = sbr.rel (%p239) target = $region40
        $region39: #{tpu_custom_call.1} parent=35 // pred_region
          %243 = dma.done %s235, 128
        $region40: #{tpu_custom_call.1} parent=35 // pred_fallthru
          _
        // Predicated region
        $region41: #{tpu_custom_call.1} parent=35 // pred_check
          %p244 = pneg %p81
        $region42: #{tpu_custom_call.1} parent=35 // pred_check_branch
          %246 = sbr.rel (%p244) target = $region44
        $region43: #{tpu_custom_call.1} parent=35 // pred_region
          %248 = dma.done [#allocation6], 2048
        $region44: #{tpu_custom_call.1} parent=35 // pred_fallthru
          _
        %s249 = sand.u32 %s42, 1
        %s250 = scalar_lea.sflag [#allocation3], %s249
        %s251 = sand.u32 %s42, 1
        %s252 = smul.addr %s251, 8
        %s253 = scalar_lea.vmem [#allocation2], %s252
        %p254 = pneg %p55
        %p255 = pneg %p52
        %p256 = pneg %p81
        %p257 = pneg %p78
        %p258 = scmp.lt.s32.totalorder %s27, 0
        %s259 = scalar_select %p258, %s27, 0
        %s260 = scalar_lea.vmem %s2, %s259
        %p261 = pneg %p107
        %p262 = pneg %p104
        %p263 = scmp.lt.s32.totalorder %s27, 0
        %s264 = scalar_select %p263, %s27, 0
        %s265 = scalar_lea.vmem %s3, %s264
        %p266 = pneg %p133
        %p267 = pneg %p130
        %p268 = pneg %p161
        %p269 = pneg %p158
        %s270 = sand.u32 %s148, 1
        %s271 = scalar_lea.sflag [#allocation4], %s270
        %s272 = sand.u32 %s148, 1
        %s273 = smul.addr %s272, 8
        %s274 = scalar_lea.vmem [#allocation7], %s273
        %p275 = scmp.lt.s32.totalorder %s27, 0
        %s276 = scalar_select %p275, %s27, 0
        %s277 = scalar_lea.vmem %s2, %s276
        %p278 = scmp.lt.s32.totalorder %s27, 0
        %s279 = scalar_select %p278, %s27, 0
        %s280 = scalar_lea.vmem %s3, %s279
        %v281 = vld [vmem:[%s238] sm:$0xff]
        %v282 = vld [vmem:[#allocation5] sm:$0xff]
        %v283 = vld [vmem:[#allocation5 + $0x8] sm:$0xff]
        %v284 = vld [vmem:[#allocation5 + $0x10] sm:$0xff]
        %v285 = vld [vmem:[#allocation5 + $0x18] sm:$0xff]
        %v286 = vld [vmem:[#allocation5 + $0x20] sm:$0xff]
        %v287 = vld [vmem:[#allocation5 + $0x28] sm:$0xff]
        %v288 = vld [vmem:[#allocation5 + $0x30] sm:$0xff]
        %v289 = vld [vmem:[#allocation5 + $0x38] sm:$0xff]
        %v290 = vld [vmem:[#allocation5 + $0x40] sm:$0xff]
        %v291 = vld [vmem:[#allocation5 + $0x48] sm:$0xff]
        %v292 = vld [vmem:[#allocation5 + $0x50] sm:$0xff]
        %v293 = vld [vmem:[#allocation5 + $0x58] sm:$0xff]
        %v294 = vld [vmem:[#allocation5 + $0x60] sm:$0xff]
        %v295 = vld [vmem:[#allocation5 + $0x68] sm:$0xff]
        %v296 = vld [vmem:[#allocation5 + $0x70] sm:$0xff]
        %v297 = vld [vmem:[#allocation5 + $0x78] sm:$0xff]
        %298 = vmatpush.msra.mxu0 %v297
        %299 = vmatpush.msra.mxu0 %v296
        %300 = vmatpush.msra.mxu0 %v295
        %301 = vmatpush.msra.mxu0 %v294
        %302 = vmatpush.msra.mxu0 %v293
        %303 = vmatpush.msra.mxu0 %v292
        %304 = vmatpush.msra.mxu0 %v291
        %305 = vmatpush.msra.mxu0 %v290
        %306 = vmatpush.msra.mxu0 %v289
        %307 = vmatpush.msra.mxu0 %v288
        %308 = vmatpush.msra.mxu0 %v287
        %309 = vmatpush.msra.mxu0 %v286
        %310 = vmatpush.msra.mxu0 %v285
        %311 = vmatpush.msra.mxu0 %v284
        %312 = vmatpush.msra.mxu0 %v283
        %313 = vmatpush.msra.mxu0 %v282
        %314 = vmatmul.f32.gmra.mxu0 %v281
        %v315 = vpop.f32.mrf.mxu0
        %v316 = vadd.f32 0.0, %v315
        %317 = vdwg.mxu0
        %v318 = vmul.f32 %v281, %v281
        %319 = vadd.xlane.f32.xlu0 %v318
        %v320 = vpop.xlane.xlu0 %319
        %v321 = vld [vmem:[%s277] sm:$0x1]
        %v323 = vperm.slane %v321, 0
        %v325 = vadd.f32 %v320, %v323
        %v326 = vmul.f32 %v325, -0.5
        %v327 = vld [vmem:[%s280] sm:$0x1]
        %v328 = vadd.f32 %v326, %v316
        %v329 = vmul.f32 %v328, 1.442695
        %v330 = vpow.pop %v329
        %v332 = vperm.slane %v327, 0
        %v334 = vmul.f32 %v332, %v330
        %335 = vst [vmem:[%s274] sm:$0xff] %v334
        %s336 = sand.u32 %s148, 1
        %s337 = scalar_lea.sflag [#allocation4], %s336
        %s338 = sand.u32 %s148, 1
        %s339 = smul.addr %s338, 8
        %s340 = scalar_lea.vmem [#allocation7], %s339
        // Predicated region
        $region45: #{tpu_custom_call.1} parent=35 // pred_check
          %p341 = pneg %p158
        $region46: #{tpu_custom_call.1} parent=35 // pred_check_branch
          %343 = sbr.rel (%p341) target = $region48
        $region47: #{tpu_custom_call.1} parent=35 // pred_region
          %345 = vsyncadd %s337, 0
          %s346 = sadd.s32 %s27, %s26
          %s347 = smul.addr %s346, 8
          %s348 = scalar_lea.hbm %s4, %s347
          %s350 = sshll.u32 %s340, 4
          %s351 = int_to_ptr.vmem [resolvable:$true] %s350
          %s352 = sshll.u32 %s348, 4
          %s353 = int_to_ptr.hbm [resolvable:$true] %s352
          %355 = dma.vmem_to_hbm [thread:$0]  %s351, 128, %s353, %s337
        $region48: #{tpu_custom_call.1} parent=35 // pred_fallthru
          _
      $region36: #{tpu_custom_call.1} parent=5 // pred_fallthru
        _
      %p356 = scmp.le.s32.totalorder 2, %s17
      // Predicated region
      $region49: #{tpu_custom_call.1} parent=5 // pred_check
        %p357 = pneg %p356
      $region50: #{tpu_custom_call.1} parent=5 // pred_check_branch
        %359 = sbr.rel (%p357) target = $region52
      $region51: #{tpu_custom_call.1} parent=5 // pred_region
        %s360 = ssub.s32 %s17, 2
        // Predicated region
        $region53: #{tpu_custom_call.1} parent=51 // pred_check
          %p361 = pneg %p164
        $region54: #{tpu_custom_call.1} parent=51 // pred_check_branch
          %363 = sbr.rel (%p361) target = $region56
        $region55: #{tpu_custom_call.1} parent=51 // pred_region
          %s364 = sand.u32 %s149, 1
          %s365 = scalar_lea.sflag [#allocation4], %s364
          %s366 = sand.u32 %s149, 1
          %s367 = smul.addr %s366, 8
          %s368 = scalar_lea.vmem [#allocation7], %s367
          %370 = dma.done %s365, 128
        $region56: #{tpu_custom_call.1} parent=51 // pred_fallthru
          _
      $region52: #{tpu_custom_call.1} parent=5 // pred_fallthru
        _
    $region6: #{tpu_custom_call.1} parent=1 // loop_footer
      %s21 = sadd.s32 1, %s17
    $region7: #{tpu_custom_call.1} parent=1 // loop_footer_branch
      %16 = sbr.rel target = $region3
    $region8: #{tpu_custom_call.1} parent=1 // loop_exit
      _
    %371 = vsyncpa [#allocation3], 1
    %s372 = scalar_lea.sflag [#allocation3], 1
    %373 = vsyncpa %s372, 1
    %374 = vsyncpa [#allocation6], 1
    %375 = vsyncpa [#allocation4], 1
    %s376 = scalar_lea.sflag [#allocation4], 1
    %377 = vsyncpa %s376, 1

</llo_original>
